<compile_context>
chip_gen: v6e
topology: v6e:2x2x1
jax: 0.10.0
libtpu: 0.0.40
codegen_flags: <defaults>
</compile_context>

<pallas_src>
import jax
import jax.numpy as jnp
from jax.experimental import pallas as pl
from jax.experimental.pallas import tpu as pltpu

NODES_IN = 300
NODES_HIDDEN = [64, 32]
NODES_OUT = 3
BN_EPS = 1e-5

# 4096-row tile: double-buffered x tile (~12.6 MB lane-padded) + intermediates
# stays ~20 MB -> safe on every generation (v7x has only 64 MiB physical VMEM;
# the 128 MiB intuition from v5e/v6e does not carry over).  On v5e/v6e, 8192
# also fits and shaves a little more per-step overhead.
TILE_B = 4096
VMEM_LIMIT_BYTES = 48 * 1024 * 1024   # < v7x 64 MiB physical; ample on v5e/v6e


def net_kernel(x_ref, w1_ref, b1_ref, w2_ref, b2_ref, w3_ref, b3_ref, o_ref):
    # fc1 + ReLU (300 -> 64); MXU with f32 accumulation regardless of input dtype.
    h = jnp.dot(x_ref[...], w1_ref[...], preferred_element_type=jnp.float32)
    h = jnp.maximum(h + b1_ref[...], 0.0)

    # BatchNorm1d (eval running stats) is folded exactly into w2/b2 on the host;
    # Dropout is identity in eval mode.
    # TODO(synk): training mode (dropout RNG mask via pltpu.prng_seed/prng_random_bits
    # and batch-statistic BN) is not implemented.

    # fc2 + ReLU (64 -> 32).  h stays f32; bf16 weights are promoted for these
    # tiny matmuls, so no extra accumulator rounding between layers.
    h = jnp.dot(h, w2_ref[...].astype(jnp.float32),
                preferred_element_type=jnp.float32)
    h = jnp.maximum(h + b2_ref[...], 0.0)

    # fc3 (32 -> 3)
    o = jnp.dot(h, w3_ref[...].astype(jnp.float32),
                preferred_element_type=jnp.float32) + b3_ref[...]

    # Lane-dense store: transpose (tb, 3) -> (3, tb) so the batch lands on the
    # 128-wide lane axis (full-width vst instead of masked 3-lane stores; VMEM
    # output buffer shrinks ~40x).  XLU slot is otherwise idle here.
    o_ref[...] = o.T.astype(o_ref.dtype)


def fold_batchnorm(params):
    """Fold the eval-mode BatchNorm affine into fc2 (exact)."""
    (w1, b1, bn_g, bn_b, bn_mu, bn_var, w2, b2, w3, b3) = params
    scale = bn_g / jnp.sqrt(bn_var + BN_EPS)          # (1, 64)
    w2f = scale.reshape(-1, 1) * w2                   # (64, 32)
    b2f = b2 + (bn_b - bn_mu * scale) @ w2            # (1, 32)
    return (w1, b1, w2f, b2f, w3, b3)


def net_forward(x, folded_params, *, tile_b=TILE_B, weights_dtype=None):
    """x: [B, 300] in f32 or natively-produced bf16.  No wrapper-side cast of x
    (that would add an extra HBM round trip on the dominant stream).
    weights_dtype: optionally cast the tiny VMEM-resident weights (e.g. bf16
    to keep v5e's MXU off the critical path); biases stay f32."""
    # TODO(synk): on v7x only, an fp8 x stream (+ per-tensor scale applied
    # in-kernel) would halve the dominant HBM read again; not done here.
    w1, b1, w2, b2, w3, b3 = folded_params
    if weights_dtype is not None:
        w1, w2, w3 = (w.astype(weights_dtype) for w in (w1, w2, w3))

    B = x.shape[0]
    if B <= tile_b:
        tb = B                       # single grid step; blocks == full arrays
    else:
        assert tile_b % 128 == 0, "lane-dense output tile must be a multiple of 128"
        tb = tile_b
    grid = (pl.cdiv(B, tb),)

    def resident(a):
        # Constant block index -> DMA'd once, stays VMEM-resident across steps.
        # (pl.Buffered(1) pipeline_mode would also drop their second pipeline
        # buffer; omitted -- the saving is only a few tens of KB.)
        return pl.BlockSpec(a.shape, lambda i: (0, 0))

    h0, h1 = NODES_HIDDEN
    flops = 2 * B * (NODES_IN * h0 + h0 * h1 + h1 * NODES_OUT)
    weight_bytes = sum(int(a.size) * a.dtype.itemsize
                       for a in (w1, b1, w2, b2, w3, b3))
    bytes_accessed = int(x.size) * x.dtype.itemsize + B * NODES_OUT * 4 + weight_bytes

    out_t = pl.pallas_call(
        net_kernel,
        out_shape=jax.ShapeDtypeStruct((NODES_OUT, B), jnp.float32),
        grid=grid,
        in_specs=[
            pl.BlockSpec((tb, NODES_IN), lambda i: (i, 0)),   # x: batch-tiled
            resident(w1), resident(b1),
            resident(w2), resident(b2),
            resident(w3), resident(b3),
        ],
        # Transposed, lane-dense output: batch on the lane axis.
        out_specs=pl.BlockSpec((NODES_OUT, tb), lambda i: (0, i)),
        compiler_params=pltpu.CompilerParams(
            dimension_semantics=("parallel",),   # 2 TCs on v7x; no-op elsewhere
            vmem_limit_bytes=VMEM_LIMIT_BYTES,
        ),
        cost_estimate=pl.CostEstimate(
            flops=flops, transcendentals=0, bytes_accessed=bytes_accessed),
    )(x, w1, b1, w2, b2, w3, b3)

    # Host-side transpose back to the module's [B, 3] layout (3*B*4 bytes, trivial).
    return out_t.T


def init_params(key):
    ks = jax.random.split(key, 8)
    h0, h1 = NODES_HIDDEN

    def linear(kw, kb, fan_in, fan_out):
        # PyTorch-style uniform(-1/sqrt(fan_in), 1/sqrt(fan_in)), stored [in, out]
        bound = 1.0 / jnp.sqrt(fan_in)
        w = jax.random.uniform(kw, (fan_in, fan_out), jnp.float32, -bound, bound)
        b = jax.random.uniform(kb, (1, fan_out), jnp.float32, -bound, bound)
        return w, b

    w1, b1 = linear(ks[0], ks[1], NODES_IN, h0)
    w2, b2 = linear(ks[2], ks[3], h0, h1)
    w3, b3 = linear(ks[4], ks[5], h1, NODES_OUT)

    # BatchNorm1d(64): nontrivial running stats to exercise the folding math
    bn_g = jnp.ones((1, h0), jnp.float32)
    bn_b = jnp.zeros((1, h0), jnp.float32)
    bn_mu = 0.1 * jax.random.normal(ks[6], (1, h0), jnp.float32)
    bn_var = 1.0 + 0.1 * jax.random.uniform(ks[7], (1, h0), jnp.float32)

    return (w1, b1, bn_g, bn_b, bn_mu, bn_var, w2, b2, w3, b3)


def reference_forward(x, params):
    (w1, b1, bn_g, bn_b, bn_mu, bn_var, w2, b2, w3, b3) = params
    h = jnp.maximum(x @ w1 + b1, 0.0)
    h = (h - bn_mu) / jnp.sqrt(bn_var + BN_EPS) * bn_g + bn_b
    h = jnp.maximum(h @ w2 + b2, 0.0)
    return h @ w3 + b3


if __name__ == "__main__":
    key = jax.random.PRNGKey(0)
    kx, kx2, kp = jax.random.split(key, 3)
    params = init_params(kp)
    folded = fold_batchnorm(params)

    # --- small batch, single grid step ---------------------------------------
    B = 8
    x = jax.random.normal(kx, (B, NODES_IN), jnp.float32)
    out = jax.block_until_ready(net_forward(x, folded))
    ref = reference_forward(x, params)
    assert out.shape == (B, NODES_OUT)
    assert jnp.allclose(out, ref, atol=5e-3, rtol=5e-3)

    # --- multi-step grid (lane-dense output tiles) incl. a partial last tile --
    B2 = 300
    x2 = jax.random.normal(kx2, (B2, NODES_IN), jnp.float32)
    out2 = jax.block_until_ready(net_forward(x2, folded, tile_b=128))
    ref2 = reference_forward(x2, params)
    assert out2.shape == (B2, NODES_OUT)
    assert jnp.allclose(out2, ref2, atol=5e-3, rtol=5e-3)

    # --- bf16 path: x produced upstream in bf16 (no wrapper cast), bf16 weights
    x_bf16 = x.astype(jnp.bfloat16)   # stands in for natively-bf16 caller data
    out_bf16 = jax.block_until_ready(
        net_forward(x_bf16, folded, weights_dtype=jnp.bfloat16))
    assert out_bf16.shape == (B, NODES_OUT)
    assert bool(jnp.all(jnp.isfinite(out_bf16)))
    assert jnp.allclose(out_bf16, ref, atol=1e-1, rtol=1e-1)

    print("KERNEL_OK")
</pallas_src>

<mosaic_0001>
module attributes {stable_mosaic.version = 11 : i64} {
  func.func @net_kernel(%arg0: i32, %arg1: memref<8x300xf32, #tpu.memory_space<vmem>>, %arg2: memref<300x64xf32, #tpu.memory_space<vmem>>, %arg3: memref<1x64xf32, #tpu.memory_space<vmem>>, %arg4: memref<64x32xf32, #tpu.memory_space<vmem>>, %arg5: memref<1x32xf32, #tpu.memory_space<vmem>>, %arg6: memref<32x3xf32, #tpu.memory_space<vmem>>, %arg7: memref<1x3xf32, #tpu.memory_space<vmem>>, %arg8: memref<3x8xf32, #tpu.memory_space<vmem>>) attributes {dimension_semantics = [#tpu.dimension_semantics<parallel>], iteration_bounds = array<i64: 1>, scalar_prefetch = 0 : i64, scratch_operands = 0 : i64, tpu.core_type = #tpu.core_type<tc>, window_params = [{transform_indices = @transform_0, window_bounds = array<i64: 8, 300>}, {pipeline_mode = #tpu.pipeline_mode<synchronous>, transform_indices = @transform_1, window_bounds = array<i64: 300, 64>}, {pipeline_mode = #tpu.pipeline_mode<synchronous>, transform_indices = @transform_2, window_bounds = array<i64: 1, 64>}, {pipeline_mode = #tpu.pipeline_mode<synchronous>, transform_indices = @transform_3, window_bounds = array<i64: 64, 32>}, {pipeline_mode = #tpu.pipeline_mode<synchronous>, transform_indices = @transform_4, window_bounds = array<i64: 1, 32>}, {pipeline_mode = #tpu.pipeline_mode<synchronous>, transform_indices = @transform_5, window_bounds = array<i64: 32, 3>}, {pipeline_mode = #tpu.pipeline_mode<synchronous>, transform_indices = @transform_6, window_bounds = array<i64: 1, 3>}, {transform_indices = @transform_7, window_bounds = array<i64: 3, 8>}]} {
    %c0 = arith.constant 0 : index
    %c0_0 = arith.constant 0 : index
    %0 = vector.load %arg1[%c0, %c0_0] : memref<8x300xf32, #tpu.memory_space<vmem>>, vector<8x300xf32>
    %c0_1 = arith.constant 0 : index
    %c0_2 = arith.constant 0 : index
    %1 = vector.load %arg2[%c0_1, %c0_2] : memref<300x64xf32, #tpu.memory_space<vmem>>, vector<300x64xf32>
    %cst = arith.constant dense<0.000000e+00> : vector<8x64xf32>
    %2 = tpu.matmul %0, %1, %cst {dimension_numbers = #tpu.dot_dimension_numbers<[1], [0], [0], [1], [0, 0, 1, 1], [], []>} : vector<8x300xf32>, vector<300x64xf32>, vector<8x64xf32> -> vector<8x64xf32>
    %c0_3 = arith.constant 0 : index
    %c0_4 = arith.constant 0 : index
    %3 = vector.load %arg3[%c0_3, %c0_4] : memref<1x64xf32, #tpu.memory_space<vmem>>, vector<1x64xf32>
    %4 = vector.broadcast %3 : vector<1x64xf32> to vector<8x64xf32>
    %5 = arith.addf %2, %4 : vector<8x64xf32>
    %cst_5 = arith.constant 0.000000e+00 : f32
    %6 = vector.broadcast %cst_5 : f32 to vector<8x64xf32>
    %7 = arith.maximumf %5, %6 : vector<8x64xf32>
    %c0_6 = arith.constant 0 : index
    %c0_7 = arith.constant 0 : index
    %8 = vector.load %arg4[%c0_6, %c0_7] : memref<64x32xf32, #tpu.memory_space<vmem>>, vector<64x32xf32>
    %cst_8 = arith.constant dense<0.000000e+00> : vector<8x32xf32>
    %9 = tpu.matmul %7, %8, %cst_8 {dimension_numbers = #tpu.dot_dimension_numbers<[1], [0], [0], [1], [0, 0, 1, 1], [], []>} : vector<8x64xf32>, vector<64x32xf32>, vector<8x32xf32> -> vector<8x32xf32>
    %c0_9 = arith.constant 0 : index
    %c0_10 = arith.constant 0 : index
    %10 = vector.load %arg5[%c0_9, %c0_10] : memref<1x32xf32, #tpu.memory_space<vmem>>, vector<1x32xf32>
    %11 = vector.broadcast %10 : vector<1x32xf32> to vector<8x32xf32>
    %12 = arith.addf %9, %11 : vector<8x32xf32>
    %cst_11 = arith.constant 0.000000e+00 : f32
    %13 = vector.broadcast %cst_11 : f32 to vector<8x32xf32>
    %14 = arith.maximumf %12, %13 : vector<8x32xf32>
    %c0_12 = arith.constant 0 : index
    %c0_13 = arith.constant 0 : index
    %15 = vector.load %arg6[%c0_12, %c0_13] : memref<32x3xf32, #tpu.memory_space<vmem>>, vector<32x3xf32>
    %cst_14 = arith.constant dense<0.000000e+00> : vector<8x3xf32>
    %16 = tpu.matmul %14, %15, %cst_14 {dimension_numbers = #tpu.dot_dimension_numbers<[1], [0], [0], [1], [0, 0, 1, 1], [], []>} : vector<8x32xf32>, vector<32x3xf32>, vector<8x3xf32> -> vector<8x3xf32>
    %c0_15 = arith.constant 0 : index
    %c0_16 = arith.constant 0 : index
    %17 = vector.load %arg7[%c0_15, %c0_16] : memref<1x3xf32, #tpu.memory_space<vmem>>, vector<1x3xf32>
    %18 = vector.broadcast %17 : vector<1x3xf32> to vector<8x3xf32>
    %19 = arith.addf %16, %18 : vector<8x3xf32>
    %20 = tpu.transpose %19, [1, 0] : vector<8x3xf32> -> vector<3x8xf32>
    %c0_17 = arith.constant 0 : index
    %c0_18 = arith.constant 0 : index
    %21 = vector.load %arg8[%c0_17, %c0_18] : memref<3x8xf32, #tpu.memory_space<vmem>>, vector<3x8xf32>
    tpu.vector_store %arg8[%c0_17, %c0_18], %20 {strides = array<i32>} : memref<3x8xf32, #tpu.memory_space<vmem>>, vector<3x8xf32>,
    return
  }
  func.func @transform_0(%arg0: i32) -> (i32, i32) {
    %c0_i32 = arith.constant 0 : i32
    %c0_i32_0 = arith.constant 0 : i32
    return %arg0, %c0_i32 : i32, i32
  }
  func.func @transform_1(%arg0: i32) -> (i32, i32) {
    %c0_i32 = arith.constant 0 : i32
    %c0_i32_0 = arith.constant 0 : i32
    %c0_i32_1 = arith.constant 0 : i32
    return %c0_i32, %c0_i32_0 : i32, i32
  }
  func.func @transform_2(%arg0: i32) -> (i32, i32) {
    %c0_i32 = arith.constant 0 : i32
    %c0_i32_0 = arith.constant 0 : i32
    %c0_i32_1 = arith.constant 0 : i32
    return %c0_i32, %c0_i32_0 : i32, i32
  }
  func.func @transform_3(%arg0: i32) -> (i32, i32) {
    %c0_i32 = arith.constant 0 : i32
    %c0_i32_0 = arith.constant 0 : i32
    %c0_i32_1 = arith.constant 0 : i32
    return %c0_i32, %c0_i32_0 : i32, i32
  }
  func.func @transform_4(%arg0: i32) -> (i32, i32) {
    %c0_i32 = arith.constant 0 : i32
    %c0_i32_0 = arith.constant 0 : i32
    %c0_i32_1 = arith.constant 0 : i32
    return %c0_i32, %c0_i32_0 : i32, i32
  }
  func.func @transform_5(%arg0: i32) -> (i32, i32) {
    %c0_i32 = arith.constant 0 : i32
    %c0_i32_0 = arith.constant 0 : i32
    %c0_i32_1 = arith.constant 0 : i32
    return %c0_i32, %c0_i32_0 : i32, i32
  }
  func.func @transform_6(%arg0: i32) -> (i32, i32) {
    %c0_i32 = arith.constant 0 : i32
    %c0_i32_0 = arith.constant 0 : i32
    %c0_i32_1 = arith.constant 0 : i32
    return %c0_i32, %c0_i32_0 : i32, i32
  }
  func.func @transform_7(%arg0: i32) -> (i32, i32) {
    %c0_i32 = arith.constant 0 : i32
    %c0_i32_0 = arith.constant 0 : i32
    return %c0_i32, %arg0 : i32, i32
  }
}

</mosaic_0001>

<llo_original>
// kernel: tpu_custom_call.1
$region0: #{tpu_custom_call.1}
  #allocation0 [shape = 'u32[]', space=smem, size = 0x4, offset = 0x4, fixed_abs, tag = 'smem constant byte address 0x4 - core index']
  #allocation1 [shape = 'u32[144,128]{1,0:T(1,128)}', space=vmem, size = 0x12000, scoped, tag = 'internal scratch']
  %s0 = inlined_call_operand.vmem [shape: f32[8,300], index: 0, kind: input, shape index: {}]
  %s1 = inlined_call_operand.vmem [shape: f32[300,64], index: 1, kind: input, shape index: {}]
  %s2 = inlined_call_operand.vmem [shape: f32[1,64], index: 2, kind: input, shape index: {}]
  %s3 = inlined_call_operand.vmem [shape: f32[64,32], index: 3, kind: input, shape index: {}]
  %s4 = inlined_call_operand.vmem [shape: f32[1,32], index: 4, kind: input, shape index: {}]
  %s5 = inlined_call_operand.vmem [shape: f32[32,3], index: 5, kind: input, shape index: {}]
  %s6 = inlined_call_operand.vmem [shape: f32[1,3], index: 6, kind: input, shape index: {}]
  %s7 = inlined_call_operand.hbm [shape: f32[3,8], index: 7, kind: output, shape index: {}]
  %s8 = sld [smem:[#allocation0]]
  $region38: #{tpu_custom_call.1} parent=0
    _
  %s10 = ssub.s32 1, %s8
  %s11 = scalar_select 0, %s10, %s8
  $region1: #{tpu_custom_call.1} parent=0
    #allocation2 [shape = 'u8[2048]{0}', space=vmem, size = 0x800, scoped, tag = 'output window, operand 0, single buffered']
    #allocation3 [shape = 's32[1]{0}', space=sflag, size = 0x4, scoped, tag = 'scoped memory for tpu_custom_call.1']
    %12 = vsyncpa [#allocation3], 0
    // Predicated region
    $region2: #{tpu_custom_call.1} parent=1 // pred_check
      _
    $region3: #{tpu_custom_call.1} parent=1 // pred_check_branch
      %14 = sbr.rel (0) target = $region5
    $region4: #{tpu_custom_call.1} parent=1 // pred_region
      _
    $region5: #{tpu_custom_call.1} parent=1 // pred_fallthru
      _
    // Predicated region
    $region6: #{tpu_custom_call.1} parent=1 // pred_check
      _
    $region7: #{tpu_custom_call.1} parent=1 // pred_check_branch
      %16 = sbr.rel (0) target = $region9
    $region8: #{tpu_custom_call.1} parent=1 // pred_region
      _
    $region9: #{tpu_custom_call.1} parent=1 // pred_fallthru
      _
    // Predicated region
    $region10: #{tpu_custom_call.1} parent=1 // pred_check
      _
    $region11: #{tpu_custom_call.1} parent=1 // pred_check_branch
      %18 = sbr.rel (0) target = $region13
    $region12: #{tpu_custom_call.1} parent=1 // pred_region
      _
    $region13: #{tpu_custom_call.1} parent=1 // pred_fallthru
      _
    // Predicated region
    $region14: #{tpu_custom_call.1} parent=1 // pred_check
      _
    $region15: #{tpu_custom_call.1} parent=1 // pred_check_branch
      %20 = sbr.rel (0) target = $region17
    $region16: #{tpu_custom_call.1} parent=1 // pred_region
      _
    $region17: #{tpu_custom_call.1} parent=1 // pred_fallthru
      _
    // Predicated region
    $region18: #{tpu_custom_call.1} parent=1 // pred_check
      _
    $region19: #{tpu_custom_call.1} parent=1 // pred_check_branch
      %22 = sbr.rel (0) target = $region21
    $region20: #{tpu_custom_call.1} parent=1 // pred_region
      _
    $region21: #{tpu_custom_call.1} parent=1 // pred_fallthru
      _
    // Predicated region
    $region22: #{tpu_custom_call.1} parent=1 // pred_check
      _
    $region23: #{tpu_custom_call.1} parent=1 // pred_check_branch
      %24 = sbr.rel (0) target = $region25
    $region24: #{tpu_custom_call.1} parent=1 // pred_region
      _
    $region25: #{tpu_custom_call.1} parent=1 // pred_fallthru
      _
    // Predicated region
    $region26: #{tpu_custom_call.1} parent=1 // pred_check
      _
    $region27: #{tpu_custom_call.1} parent=1 // pred_check_branch
      %26 = sbr.rel (0) target = $region29
    $region28: #{tpu_custom_call.1} parent=1 // pred_region
      _
    $region29: #{tpu_custom_call.1} parent=1 // pred_fallthru
      _
    %v27 = vld [vmem:[%s0] sm:$0xff]
    %v28 = vld [vmem:[%s0 + $0x8] sm:$0xff]
    %v29 = vld [vmem:[%s0 + $0x10] sm:$0xff]
    %v30 = vld [vmem:[%s1] sm:$0xff]
    %v31 = vld [vmem:[%s1 + $0x8] sm:$0xff]
    %v32 = vld [vmem:[%s1 + $0x10] sm:$0xff]
    %v33 = vld [vmem:[%s1 + $0x18] sm:$0xff]
    %v34 = vld [vmem:[%s1 + $0x20] sm:$0xff]
    %v35 = vld [vmem:[%s1 + $0x28] sm:$0xff]
    %v36 = vld [vmem:[%s1 + $0x30] sm:$0xff]
    %v37 = vld [vmem:[%s1 + $0x38] sm:$0xff]
    %v38 = vld [vmem:[%s1 + $0x40] sm:$0xff]
    %v39 = vld [vmem:[%s1 + $0x48] sm:$0xff]
    %v40 = vld [vmem:[%s1 + $0x50] sm:$0xff]
    %v41 = vld [vmem:[%s1 + $0x58] sm:$0xff]
    %v42 = vld [vmem:[%s1 + $0x60] sm:$0xff]
    %v43 = vld [vmem:[%s1 + $0x68] sm:$0xff]
    %v44 = vld [vmem:[%s1 + $0x70] sm:$0xff]
    %v45 = vld [vmem:[%s1 + $0x78] sm:$0xff]
    %v46 = vld [vmem:[%s1 + $0x80] sm:$0xff]
    %v47 = vld [vmem:[%s1 + $0x88] sm:$0xff]
    %v48 = vld [vmem:[%s1 + $0x90] sm:$0xff]
    %v49 = vld [vmem:[%s1 + $0x98] sm:$0xff]
    %v50 = vld [vmem:[%s1 + $0xa0] sm:$0xff]
    %v51 = vld [vmem:[%s1 + $0xa8] sm:$0xff]
    %v52 = vld [vmem:[%s1 + $0xb0] sm:$0xff]
    %v53 = vld [vmem:[%s1 + $0xb8] sm:$0xff]
    %v54 = vld [vmem:[%s1 + $0xc0] sm:$0xff]
    %v55 = vld [vmem:[%s1 + $0xc8] sm:$0xff]
    %v56 = vld [vmem:[%s1 + $0xd0] sm:$0xff]
    %v57 = vld [vmem:[%s1 + $0xd8] sm:$0xff]
    %v58 = vld [vmem:[%s1 + $0xe0] sm:$0xff]
    %v59 = vld [vmem:[%s1 + $0xe8] sm:$0xff]
    %v60 = vld [vmem:[%s1 + $0xf0] sm:$0xff]
    %v61 = vld [vmem:[%s1 + $0xf8] sm:$0xff]
    %v62 = vld [vmem:[%s1 + $0x100] sm:$0xff]
    %v63 = vld [vmem:[%s1 + $0x108] sm:$0xff]
    %v64 = vld [vmem:[%s1 + $0x110] sm:$0xff]
    %v65 = vld [vmem:[%s1 + $0x118] sm:$0xff]
    %v66 = vld [vmem:[%s1 + $0x120] sm:$0xff]
    %v67 = vld [vmem:[%s1 + $0x128] sm:$0xf]
    %v68 = vld [vmem:[%s2] sm:$0x1]
    %v70 = vlaneseq
    %v71 = vshrl.u32 %v70, 7
    %v72 = vsub.s32 0, %v71
    %v73 = vrot.slane %v68, %v72
    %vm75 = vcmask 359424
    %v77 = vsel %vm75, %v29, 0
    %vm79 = vcmask 1043456
    %v81 = vsel %vm79, %v67, 0
    %83 = vmatprep.subr.mxu0 0.0
    %84 = vmatpush1.msra.mxu0 %v45
    %85 = vmatprep.subr.mxu0 0.0
    %86 = vmatpush1.msra.mxu0 %v44
    %87 = vmatprep.subr.mxu0 0.0
    %88 = vmatpush1.msra.mxu0 %v43
    %89 = vmatprep.subr.mxu0 0.0
    %90 = vmatpush1.msra.mxu0 %v42
    %91 = vmatprep.subr.mxu0 0.0
    %92 = vmatpush1.msra.mxu0 %v41
    %93 = vmatprep.subr.mxu0 0.0
    %94 = vmatpush1.msra.mxu0 %v40
    %95 = vmatprep.subr.mxu0 0.0
    %96 = vmatpush1.msra.mxu0 %v39
    %97 = vmatprep.subr.mxu0 0.0
    %98 = vmatpush1.msra.mxu0 %v38
    %99 = vmatprep.subr.mxu0 0.0
    %100 = vmatpush1.msra.mxu0 %v37
    %101 = vmatprep.subr.mxu0 0.0
    %102 = vmatpush1.msra.mxu0 %v36
    %103 = vmatprep.subr.mxu0 0.0
    %104 = vmatpush1.msra.mxu0 %v35
    %105 = vmatprep.subr.mxu0 0.0
    %106 = vmatpush1.msra.mxu0 %v34
    %107 = vmatprep.subr.mxu0 0.0
    %108 = vmatpush1.msra.mxu0 %v33
    %109 = vmatprep.subr.mxu0 0.0
    %110 = vmatpush1.msra.mxu0 %v32
    %111 = vmatprep.subr.mxu0 0.0
    %112 = vmatpush1.msra.mxu0 %v31
    %113 = vmatprep.subr.mxu0 0.0
    %114 = vmatpush1.msra.mxu0 %v30
    %115 = vmatprep.subr.mxu0 0.0
    %116 = vmatpush2.msra.mxu0 %v61
    %117 = vmatprep.subr.mxu0 0.0
    %118 = vmatpush2.msra.mxu0 %v60
    %119 = vmatprep.subr.mxu0 0.0
    %120 = vmatpush2.msra.mxu0 %v59
    %121 = vmatprep.subr.mxu0 0.0
    %122 = vmatpush2.msra.mxu0 %v58
    %123 = vmatprep.subr.mxu0 0.0
    %124 = vmatpush2.msra.mxu0 %v57
    %125 = vmatprep.subr.mxu0 0.0
    %126 = vmatpush2.msra.mxu0 %v56
    %127 = vmatprep.subr.mxu0 0.0
    %128 = vmatpush2.msra.mxu0 %v55
    %129 = vmatprep.subr.mxu0 0.0
    %130 = vmatpush2.msra.mxu0 %v54
    %131 = vmatprep.subr.mxu0 0.0
    %132 = vmatpush2.msra.mxu0 %v53
    %133 = vmatprep.subr.mxu0 0.0
    %134 = vmatpush2.msra.mxu0 %v52
    %135 = vmatprep.subr.mxu0 0.0
    %136 = vmatpush2.msra.mxu0 %v51
    %137 = vmatprep.subr.mxu0 0.0
    %138 = vmatpush2.msra.mxu0 %v50
    %139 = vmatprep.subr.mxu0 0.0
    %140 = vmatpush2.msra.mxu0 %v49
    %141 = vmatprep.subr.mxu0 0.0
    %142 = vmatpush2.msra.mxu0 %v48
    %143 = vmatprep.subr.mxu0 0.0
    %144 = vmatpush2.msra.mxu0 %v47
    %145 = vmatprep.subr.mxu0 0.0
    %146 = vmatpush2.msra.mxu0 %v46
    %147 = vmatprep.mubr.f32.mxu0 %v28
    %148 = vmatmul.mubr.f32.gmra.mxu0 %v27
    %v149 = vpop.f32.mrf.mxu0
    %v150 = vadd.f32 %v73, %v149
    %v151 = vpop.f32.mrf.mxu0
    %152 = vdwg.mxu0
    %153 = vmatprep.subr.mxu0 0.0
    %154 = vmatpush1.msra.mxu0 0.0
    %155 = vmatprep.subr.mxu0 0.0
    %156 = vmatpush1.msra.mxu0 0.0
    %157 = vmatprep.subr.mxu0 0.0
    %158 = vmatpush1.msra.mxu0 0.0
    %159 = vmatprep.subr.mxu0 0.0
    %160 = vmatpush1.msra.mxu0 0.0
    %161 = vmatprep.subr.mxu0 0.0
    %162 = vmatpush1.msra.mxu0 0.0
    %163 = vmatprep.subr.mxu0 0.0
    %164 = vmatpush1.msra.mxu0 0.0
    %165 = vmatprep.subr.mxu0 0.0
    %166 = vmatpush1.msra.mxu0 0.0
    %167 = vmatprep.subr.mxu0 0.0
    %168 = vmatpush1.msra.mxu0 0.0
    %169 = vmatprep.subr.mxu0 0.0
    %170 = vmatpush1.msra.mxu0 0.0
    %171 = vmatprep.subr.mxu0 0.0
    %172 = vmatpush1.msra.mxu0 0.0
    %173 = vmatprep.subr.mxu0 0.0
    %174 = vmatpush1.msra.mxu0 %v81
    %175 = vmatprep.subr.mxu0 0.0
    %176 = vmatpush1.msra.mxu0 %v66
    %177 = vmatprep.subr.mxu0 0.0
    %178 = vmatpush1.msra.mxu0 %v65
    %179 = vmatprep.subr.mxu0 0.0
    %180 = vmatpush1.msra.mxu0 %v64
    %181 = vmatprep.subr.mxu0 0.0
    %182 = vmatpush1.msra.mxu0 %v63
    %183 = vmatprep.subr.mxu0 0.0
    %184 = vmatpush1.msra.mxu0 %v62
    %185 = vmatprep.subr.mxu0 0.0
    %186 = vmatpush2.msra.mxu0 0.0
    %187 = vmatprep.subr.mxu0 0.0
    %188 = vmatpush2.msra.mxu0 0.0
    %189 = vmatprep.subr.mxu0 0.0
    %190 = vmatpush2.msra.mxu0 0.0
    %191 = vmatprep.subr.mxu0 0.0
    %192 = vmatpush2.msra.mxu0 0.0
    %193 = vmatprep.subr.mxu0 0.0
    %194 = vmatpush2.msra.mxu0 0.0
    %195 = vmatprep.subr.mxu0 0.0
    %196 = vmatpush2.msra.mxu0 0.0
    %197 = vmatprep.subr.mxu0 0.0
    %198 = vmatpush2.msra.mxu0 0.0
    %199 = vmatprep.subr.mxu0 0.0
    %200 = vmatpush2.msra.mxu0 0.0
    %201 = vmatprep.subr.mxu0 0.0
    %202 = vmatpush2.msra.mxu0 0.0
    %203 = vmatprep.subr.mxu0 0.0
    %204 = vmatpush2.msra.mxu0 0.0
    %205 = vmatprep.subr.mxu0 0.0
    %206 = vmatpush2.msra.mxu0 0.0
    %207 = vmatprep.subr.mxu0 0.0
    %208 = vmatpush2.msra.mxu0 0.0
    %209 = vmatprep.subr.mxu0 0.0
    %210 = vmatpush2.msra.mxu0 0.0
    %211 = vmatprep.subr.mxu0 0.0
    %212 = vmatpush2.msra.mxu0 0.0
    %213 = vmatprep.subr.mxu0 0.0
    %214 = vmatpush2.msra.mxu0 0.0
    %215 = vmatprep.subr.mxu0 0.0
    %216 = vmatpush2.msra.mxu0 0.0
    %217 = vmatprep.mubr.f32.mxu0 0.0
    %218 = vmatmul.mubr.f32.gmra.mxu0 %v77
    %v219 = vpop.f32.mrf.mxu0
    %v220 = vadd.f32 %v150, %v219
    %v221 = vpop.f32.mrf.mxu0
    %222 = vdwg.mxu0
    %v223 = vmax.f32 %v220, 0.0
    %v224 = vld [vmem:[%s3] sm:$0xff]
    %v225 = vld [vmem:[%s3 + $0x8] sm:$0xff]
    %v226 = vld [vmem:[%s3 + $0x10] sm:$0xff]
    %v227 = vld [vmem:[%s3 + $0x18] sm:$0xff]
    %v228 = vld [vmem:[%s3 + $0x20] sm:$0xff]
    %v229 = vld [vmem:[%s3 + $0x28] sm:$0xff]
    %v230 = vld [vmem:[%s3 + $0x30] sm:$0xff]
    %v231 = vld [vmem:[%s3 + $0x38] sm:$0xff]
    %v232 = vld [vmem:[%s4] sm:$0x1]
    %v234 = vlaneseq
    %v235 = vshrl.u32 %v234, 7
    %v236 = vsub.s32 0, %v235
    %v237 = vrot.slane %v232, %v236
    %vm239 = vcmask 523264
    %v241 = vsel %vm239, %v223, 0
    %243 = vmatprep.subr.mxu0 0.0
    %244 = vmatpush1.msra.mxu0 0.0
    %245 = vmatprep.subr.mxu0 0.0
    %246 = vmatpush1.msra.mxu0 0.0
    %247 = vmatprep.subr.mxu0 0.0
    %248 = vmatpush1.msra.mxu0 0.0
    %249 = vmatprep.subr.mxu0 0.0
    %250 = vmatpush1.msra.mxu0 0.0
    %251 = vmatprep.subr.mxu0 0.0
    %252 = vmatpush1.msra.mxu0 0.0
    %253 = vmatprep.subr.mxu0 0.0
    %254 = vmatpush1.msra.mxu0 0.0
    %255 = vmatprep.subr.mxu0 0.0
    %256 = vmatpush1.msra.mxu0 0.0
    %257 = vmatprep.subr.mxu0 0.0
    %258 = vmatpush1.msra.mxu0 0.0
    %259 = vmatprep.subr.mxu0 0.0
    %260 = vmatpush1.msra.mxu0 %v231
    %261 = vmatprep.subr.mxu0 0.0
    %262 = vmatpush1.msra.mxu0 %v230
    %263 = vmatprep.subr.mxu0 0.0
    %264 = vmatpush1.msra.mxu0 %v229
    %265 = vmatprep.subr.mxu0 0.0
    %266 = vmatpush1.msra.mxu0 %v228
    %267 = vmatprep.subr.mxu0 0.0
    %268 = vmatpush1.msra.mxu0 %v227
    %269 = vmatprep.subr.mxu0 0.0
    %270 = vmatpush1.msra.mxu0 %v226
    %271 = vmatprep.subr.mxu0 0.0
    %272 = vmatpush1.msra.mxu0 %v225
    %273 = vmatprep.subr.mxu0 0.0
    %274 = vmatpush1.msra.mxu0 %v224
    %275 = vmatprep.subr.mxu0 0.0
    %276 = vmatpush2.msra.mxu0 0.0
    %277 = vmatprep.subr.mxu0 0.0
    %278 = vmatpush2.msra.mxu0 0.0
    %279 = vmatprep.subr.mxu0 0.0
    %280 = vmatpush2.msra.mxu0 0.0
    %281 = vmatprep.subr.mxu0 0.0
    %282 = vmatpush2.msra.mxu0 0.0
    %283 = vmatprep.subr.mxu0 0.0
    %284 = vmatpush2.msra.mxu0 0.0
    %285 = vmatprep.subr.mxu0 0.0
    %286 = vmatpush2.msra.mxu0 0.0
    %287 = vmatprep.subr.mxu0 0.0
    %288 = vmatpush2.msra.mxu0 0.0
    %289 = vmatprep.subr.mxu0 0.0
    %290 = vmatpush2.msra.mxu0 0.0
    %291 = vmatprep.subr.mxu0 0.0
    %292 = vmatpush2.msra.mxu0 0.0
    %293 = vmatprep.subr.mxu0 0.0
    %294 = vmatpush2.msra.mxu0 0.0
    %295 = vmatprep.subr.mxu0 0.0
    %296 = vmatpush2.msra.mxu0 0.0
    %297 = vmatprep.subr.mxu0 0.0
    %298 = vmatpush2.msra.mxu0 0.0
    %299 = vmatprep.subr.mxu0 0.0
    %300 = vmatpush2.msra.mxu0 0.0
    %301 = vmatprep.subr.mxu0 0.0
    %302 = vmatpush2.msra.mxu0 0.0
    %303 = vmatprep.subr.mxu0 0.0
    %304 = vmatpush2.msra.mxu0 0.0
    %305 = vmatprep.subr.mxu0 0.0
    %306 = vmatpush2.msra.mxu0 0.0
    %307 = vmatprep.mubr.f32.mxu0 0.0
    %308 = vmatmul.mubr.f32.gmra.mxu0 %v241
    %v309 = vpop.f32.mrf.mxu0
    %v310 = vadd.f32 %v237, %v309
    %v311 = vpop.f32.mrf.mxu0
    %312 = vdwg.mxu0
    %v313 = vmax.f32 %v310, 0.0
    %v314 = vld [vmem:[%s5] sm:$0xff]
    %v315 = vld [vmem:[%s5 + $0x8] sm:$0xff]
    %v316 = vld [vmem:[%s5 + $0x10] sm:$0xff]
    %v317 = vld [vmem:[%s5 + $0x18] sm:$0xff]
    %v318 = vld [vmem:[%s6] sm:$0x1]
    %v320 = vlaneseq
    %v321 = vshrl.u32 %v320, 7
    %v322 = vsub.s32 0, %v321
    %v323 = vrot.slane %v318, %v322
    %vm325 = vcmask 261120
    %v327 = vsel %vm325, %v313, 0
    %329 = vmatprep.subr.mxu0 0.0
    %330 = vmatpush1.msra.mxu0 0.0
    %331 = vmatprep.subr.mxu0 0.0
    %332 = vmatpush1.msra.mxu0 0.0
    %333 = vmatprep.subr.mxu0 0.0
    %334 = vmatpush1.msra.mxu0 0.0
    %335 = vmatprep.subr.mxu0 0.0
    %336 = vmatpush1.msra.mxu0 0.0
    %337 = vmatprep.subr.mxu0 0.0
    %338 = vmatpush1.msra.mxu0 0.0
    %339 = vmatprep.subr.mxu0 0.0
    %340 = vmatpush1.msra.mxu0 0.0
    %341 = vmatprep.subr.mxu0 0.0
    %342 = vmatpush1.msra.mxu0 0.0
    %343 = vmatprep.subr.mxu0 0.0
    %344 = vmatpush1.msra.mxu0 0.0
    %345 = vmatprep.subr.mxu0 0.0
    %346 = vmatpush1.msra.mxu0 0.0
    %347 = vmatprep.subr.mxu0 0.0
    %348 = vmatpush1.msra.mxu0 0.0
    %349 = vmatprep.subr.mxu0 0.0
    %350 = vmatpush1.msra.mxu0 0.0
    %351 = vmatprep.subr.mxu0 0.0
    %352 = vmatpush1.msra.mxu0 0.0
    %353 = vmatprep.subr.mxu0 0.0
    %354 = vmatpush1.msra.mxu0 %v317
    %355 = vmatprep.subr.mxu0 0.0
    %356 = vmatpush1.msra.mxu0 %v316
    %357 = vmatprep.subr.mxu0 0.0
    %358 = vmatpush1.msra.mxu0 %v315
    %359 = vmatprep.subr.mxu0 0.0
    %360 = vmatpush1.msra.mxu0 %v314
    %361 = vmatprep.subr.mxu0 0.0
    %362 = vmatpush2.msra.mxu0 0.0
    %363 = vmatprep.subr.mxu0 0.0
    %364 = vmatpush2.msra.mxu0 0.0
    %365 = vmatprep.subr.mxu0 0.0
    %366 = vmatpush2.msra.mxu0 0.0
    %367 = vmatprep.subr.mxu0 0.0
    %368 = vmatpush2.msra.mxu0 0.0
    %369 = vmatprep.subr.mxu0 0.0
    %370 = vmatpush2.msra.mxu0 0.0
    %371 = vmatprep.subr.mxu0 0.0
    %372 = vmatpush2.msra.mxu0 0.0
    %373 = vmatprep.subr.mxu0 0.0
    %374 = vmatpush2.msra.mxu0 0.0
    %375 = vmatprep.subr.mxu0 0.0
    %376 = vmatpush2.msra.mxu0 0.0
    %377 = vmatprep.subr.mxu0 0.0
    %378 = vmatpush2.msra.mxu0 0.0
    %379 = vmatprep.subr.mxu0 0.0
    %380 = vmatpush2.msra.mxu0 0.0
    %381 = vmatprep.subr.mxu0 0.0
    %382 = vmatpush2.msra.mxu0 0.0
    %383 = vmatprep.subr.mxu0 0.0
    %384 = vmatpush2.msra.mxu0 0.0
    %385 = vmatprep.subr.mxu0 0.0
    %386 = vmatpush2.msra.mxu0 0.0
    %387 = vmatprep.subr.mxu0 0.0
    %388 = vmatpush2.msra.mxu0 0.0
    %389 = vmatprep.subr.mxu0 0.0
    %390 = vmatpush2.msra.mxu0 0.0
    %391 = vmatprep.subr.mxu0 0.0
    %392 = vmatpush2.msra.mxu0 0.0
    %393 = vmatprep.mubr.f32.mxu0 0.0
    %394 = vmatmul.mubr.f32.gmra.mxu0 %v327
    %v395 = vpop.f32.mrf.mxu0
    %v396 = vadd.f32 %v323, %v395
    %v397 = vpop.f32.mrf.mxu0
    %398 = vdwg.mxu0
    %399 = vxpose.xlu0.b32.start [1/16] %v396, 128
    %400 = vxpose.xlu0.b32.cont [2/16] 0.0, 128
    %401 = vxpose.xlu0.b32.cont [3/16] 0.0, 128
    %402 = vxpose.xlu0.b32.cont [4/16] 0.0, 128
    %403 = vxpose.xlu0.b32.cont [5/16] 0.0, 128
    %404 = vxpose.xlu0.b32.cont [6/16] 0.0, 128
    %405 = vxpose.xlu0.b32.cont [7/16] 0.0, 128
    %406 = vxpose.xlu0.b32.cont [8/16] 0.0, 128
    %407 = vxpose.xlu0.b32.cont [9/16] 0.0, 128
    %408 = vxpose.xlu0.b32.cont [10/16] 0.0, 128
    %409 = vxpose.xlu0.b32.cont [11/16] 0.0, 128
    %410 = vxpose.xlu0.b32.cont [12/16] 0.0, 128
    %411 = vxpose.xlu0.b32.cont [13/16] 0.0, 128
    %412 = vxpose.xlu0.b32.cont [14/16] 0.0, 128
    %413 = vxpose.xlu0.b32.cont [15/16] 0.0, 128
    %414 = vxpose.xlu0.b32.end [16/16] 0.0, 128
    %v415 = vpop.trf.xlu0
    %v416 = vpop.trf.xlu0
    %v417 = vpop.trf.xlu0
    %v418 = vpop.trf.xlu0
    %v419 = vpop.trf.xlu0
    %v420 = vpop.trf.xlu0
    %v421 = vpop.trf.xlu0
    %v422 = vpop.trf.xlu0
    %v423 = vpop.trf.xlu0
    %v424 = vpop.trf.xlu0
    %v425 = vpop.trf.xlu0
    %v426 = vpop.trf.xlu0
    %v427 = vpop.trf.xlu0
    %v428 = vpop.trf.xlu0
    %v429 = vpop.trf.xlu0
    %v430 = vpop.trf.xlu0
    %vm431 = vcmask 59392
    %432 = vst.msk [vmem:[#allocation2] sm:$0x7] %vm431, %v415
    // Predicated region
    $region30: #{tpu_custom_call.1} parent=1 // pred_check
      _
    $region31: #{tpu_custom_call.1} parent=1 // pred_check_branch
      %434 = sbr.rel (0) target = $region33
    $region32: #{tpu_custom_call.1} parent=1 // pred_region
      %s436 = ssub.s32 64, 64
      %437 = vsyncadd [#allocation3], %s436
      %s439 = sshll.u32 [#allocation2], 4
      %s440 = int_to_ptr.vmem [resolvable:$true] %s439
      %442 = dma.vmem_to_hbm [thread:$0]  %s440, 64, %s7, [#allocation3]
    $region33: #{tpu_custom_call.1} parent=1 // pred_fallthru
      _
    // Predicated region
    $region34: #{tpu_custom_call.1} parent=1 // pred_check
      _
    $region35: #{tpu_custom_call.1} parent=1 // pred_check_branch
      %444 = sbr.rel (0) target = $region37
    $region36: #{tpu_custom_call.1} parent=1 // pred_region
      %445 = dma.done [#allocation3], 64
    $region37: #{tpu_custom_call.1} parent=1 // pred_fallthru
      _
    %446 = vsyncpa [#allocation3], 1

</llo_original>
